<compile_context>
chip_gen: v5e
topology: v5e:2x2
jax: 0.10.0
libtpu: 0.0.40
codegen_flags: <defaults>
</compile_context>

<pallas_src>
import numpy as np
import jax
import jax.numpy as jnp
from jax import lax
from jax.experimental import pallas as pl
from jax.experimental.pallas import tpu as pltpu

NEG_SLOPE = 0.2                     # LeakyReLU negative slope from the module
NEG_INF = -1e30


# ---------------- per-generation configuration ----------------

def _generation_config():
    """Pick dst-node tile width and VMEM budget per TPU generation."""
    tn = 128                                   # matches v5e's 128-wide MXU
    vmem_limit = 48 * 1024 * 1024              # safe everywhere (v7x: 64 MiB/TC)
    kind = ""
    try:
        kind = jax.devices()[0].device_kind.lower()
    except Exception:
        pass
    if ("v6" in kind) or ("v7" in kind) or ("7x" in kind):
        tn = 256                               # 256-wide MXU on v6e / v7x
    try:
        phys = int(pltpu.get_tpu_info().vmem_capacity_bytes)
        vmem_limit = max(32 * 1024 * 1024,
                         min(phys - 16 * 1024 * 1024, 110 * 1024 * 1024))
    except Exception:
        pass                                   # keep conservative default
    return tn, vmem_limit


# ---------------- host-side graph preprocessing (glue) ----------------

def _build_dst_buckets(src, dst, tile_n, num_tiles, lane_multiple=128):
    """Sort edges by destination; bucket into fixed-capacity per-dst-tile slabs.

    Per-tile slabs are lane-dense: src / local-dst ids are stored in row 8*t of
    a (num_tiles*8, TE) int32 array (8-row stride keeps BlockSpecs (8,TE)).
    """
    E = int(src.shape[0])
    order = np.argsort(dst, kind="stable").astype(np.int64)
    ssrc = src[order].astype(np.int32)
    sdst = dst[order].astype(np.int32)
    tile_of = sdst // tile_n
    counts = np.bincount(tile_of, minlength=num_tiles).astype(np.int32)
    te = int(counts.max()) if E > 0 else 1
    # TODO(synk): cap TE and add an edge-slab grid axis for skewed-degree graphs.
    te = max(lane_multiple, ((te + lane_multiple - 1) // lane_multiple) * lane_multiple)
    src_rows = np.zeros((num_tiles * 8, te), np.int32)
    dloc_rows = np.zeros((num_tiles * 8, te), np.int32)
    pos_sorted = np.zeros((E,), np.int64)
    start = 0
    for t in range(num_tiles):
        k = int(counts[t])
        sl = slice(start, start + k)
        src_rows[8 * t, :k] = ssrc[sl]
        dloc_rows[8 * t, :k] = sdst[sl] - t * tile_n
        pos_sorted[sl] = t * te + np.arange(k)
        start += k
    return order, counts, te, src_rows, dloc_rows, pos_sorted


# ---------------- forward ----------------

def my_gat_conv2_forward(feat, e_feat0, src, dst, params,
                         num_heads, out_feats, edge_feats):
    N, Fin = feat.shape
    E = int(src.shape[0])
    H, F, EF = num_heads, out_feats, edge_feats
    HF = H * F
    C = HF + 2 * H                       # node-table columns: [proj | el | er]
    C_pad = max(128, -(-C // 128) * 128)  # lane-aligned table row width

    TN, vmem_limit = _generation_config()
    num_tiles = -(-N // TN)
    N_pad = num_tiles * TN

    # ---- host-side bucketing: sort edges by dst, fixed-capacity slabs per dst tile ----
    order, counts, TE, src_rows, dloc_rows, pos_sorted = _build_dst_buckets(
        np.asarray(src), np.asarray(dst), TN, num_tiles)
    E_pad = num_tiles * TE

    # ---- fold attention vectors into the projection weights (glue) ----
    al = params["attn_l"].reshape(HF)
    ar = params["attn_r"].reshape(HF)
    ae = params["attn_e"].reshape(H * EF)
    bsum_n = jnp.repeat(jnp.eye(H, dtype=jnp.float32), F, axis=0)     # (H*F, H)
    bsum_e = jnp.repeat(jnp.eye(H, dtype=jnp.float32), EF, axis=0)    # (H*EF, H)
    W_fc = params["W_fc"].astype(jnp.float32)                         # (Fin, H*F)
    W_l = (W_fc * al[None, :]) @ bsum_n                               # (Fin, H)
    W_r = (W_fc * ar[None, :]) @ bsum_n                               # (Fin, H)
    W_all = jnp.zeros((Fin, C_pad), jnp.float32)
    W_all = W_all.at[:, :HF].set(W_fc)
    W_all = W_all.at[:, HF:HF + H].set(W_l)
    W_all = W_all.at[:, HF + H:HF + 2 * H].set(W_r)

    # ee collapses to a tiny (num_etypes, H) table + per-edge lookup (glue)
    W_e = (params["W_fc_e"].astype(jnp.float32) * ae[None, :]) @ bsum_e   # (EF, H)
    ee_table = params["edge_emb"].astype(jnp.float32) @ W_e               # (NET, H)
    ee_edge = jnp.take(ee_table, e_feat0, axis=0)                         # (E, H)
    ee_pad = jnp.zeros((E_pad, H), jnp.float32).at[pos_sorted].set(ee_edge[order])

    feat_pad = jnp.zeros((N_pad, Fin), jnp.float32).at[:N, :].set(feat.astype(jnp.float32))
    counts_j = jnp.asarray(counts)
    src_rows_j = jnp.asarray(src_rows)
    dloc_rows_j = jnp.asarray(dloc_rows)

    # ---------------- kernel 1: node projection  node_tab = feat @ [W_fc | W_l | W_r] ----------------
    k1 = 1
    for cand in (8, 4, 2):
        if num_tiles % cand == 0 and cand * TN <= 1024:
            k1 = cand
            break
    TM1 = k1 * TN
    grid1 = N_pad // TM1

    def node_proj_kernel(x_ref, w_ref, tab_ref):
        tab_ref[...] = jnp.dot(x_ref[...], w_ref[...],
                               preferred_element_type=jnp.float32)

    node_tab = pl.pallas_call(
        node_proj_kernel,
        grid=(grid1,),
        in_specs=[pl.BlockSpec((TM1, Fin), lambda i: (i, 0)),
                  pl.BlockSpec((Fin, C_pad), lambda i: (0, 0))],
        out_specs=pl.BlockSpec((TM1, C_pad), lambda i: (i, 0)),
        out_shape=jax.ShapeDtypeStruct((N_pad, C_pad), jnp.float32),
        compiler_params=pltpu.CompilerParams(
            dimension_semantics=("parallel",),
            vmem_limit_bytes=vmem_limit),
        cost_estimate=pl.CostEstimate(
            flops=int(2 * N_pad * Fin * C_pad),
            transcendentals=0,
            bytes_accessed=int(4 * (N_pad * Fin + Fin * C_pad + N_pad * C_pad))),
    )(feat_pad, W_all)

    # ---------------- kernel 2: per-dst-tile attention + aggregation ----------------
    def make_edge_kernel(gather_mode):
        def gat_edge_kernel(cnt_ref, src_ref, dloc_ref, tab_ref, ee_ref, rst_ref, a_ref):
            t = pl.program_id(0)
            cnt = cnt_ref[t]

            tab = tab_ref[...]                                    # (N_pad, C_pad) resident table
            src_vec = src_ref[0, :]                               # (TE,) int32, lane-dense
            if gather_mode == "take":
                # vectorized row gather of the src rows ([proj | el | er])
                rows = jnp.take(tab, src_vec, axis=0,
                                mode="promise_in_bounds")         # (TE, C_pad)
            else:
                # exact one-hot MXU gather fallback (always lowerable)
                src_l = src_ref[0:1, :]                           # (1, TE)
                nn = lax.broadcasted_iota(jnp.int32, (N_pad, TE), 0)
                onehot_t = (nn == src_l).astype(jnp.float32)      # (N_pad, TE)
                rows = lax.dot_general(onehot_t, tab, (((0,), (0,)), ((), ())),
                                       preferred_element_type=jnp.float32)

            ft = rows[:, :HF]                                     # (TE, HF)  feat_src[src]
            el_e = rows[:, HF:HF + H]                             # (TE, H)   el[src]
            base = pl.multiple_of(t * TN, TN)
            er_n = tab_ref[pl.ds(base, TN), pl.ds(HF + H, H)]     # (TN, H)   er of this dst tile

            # local dst one-hot (TN, TE), built from lane-dense dloc (no transposes)
            dloc = dloc_ref[0:1, :]                               # (1, TE) int32
            n_iota = lax.broadcasted_iota(jnp.int32, (TN, TE), 0)
            e_iota = lax.broadcasted_iota(jnp.int32, (TN, TE), 1)
            seg = jnp.logical_and(n_iota == dloc, e_iota < cnt).astype(jnp.float32)
            valid = lax.broadcasted_iota(jnp.int32, (TE, 1), 0) < cnt     # (TE, 1)

            # er per edge + logits + LeakyReLU
            er_e = lax.dot_general(seg, er_n, (((0,), (0,)), ((), ())),
                                   preferred_element_type=jnp.float32)    # (TE, H)
            logits = el_e + er_e + ee_ref[...]
            logits = jnp.where(logits > 0, logits, NEG_SLOPE * logits)

            # per-tile, per-head max over valid edges: the shift is constant inside
            # every dst segment, so the softmax ratio is exact; exp args stay <= 0
            # and invalid rows are masked *before* the exp (no inf is ever formed).
            m = jnp.max(jnp.where(valid, logits, NEG_INF), axis=0, keepdims=True)  # (1, H)
            p = jnp.where(valid, jnp.exp(jnp.where(valid, logits - m, 0.0)), 0.0)  # (TE, H)

            denom = jnp.dot(seg, p, preferred_element_type=jnp.float32)            # (TN, H)
            denom_e = lax.dot_general(seg, denom, (((0,), (0,)), ((), ())),
                                      preferred_element_type=jnp.float32)          # (TE, H)
            a = p * pl.reciprocal(jnp.where(denom_e > 0, denom_e, 1.0), approx=True)
            a_ref[...] = a

            # fused per-head aggregation: expand a across each head's F columns with
            # a block-diagonal 0/1 matrix (one small MXU call), then one segment-sum
            # matmul in bf16 with f32 accumulation.
            h_iota = lax.broadcasted_iota(jnp.int32, (H, HF), 0) * F
            c_iota = lax.broadcasted_iota(jnp.int32, (H, HF), 1)
            expand = jnp.logical_and(c_iota >= h_iota, c_iota < h_iota + F).astype(jnp.float32)
            w = jnp.dot(a, expand, preferred_element_type=jnp.float32) * ft        # (TE, HF)
            rst_ref[...] = jnp.dot(seg.astype(jnp.bfloat16), w.astype(jnp.bfloat16),
                                   preferred_element_type=jnp.float32)             # (TN, HF)
        return gat_edge_kernel

    grid_spec = pltpu.PrefetchScalarGridSpec(
        num_scalar_prefetch=1,
        grid=(num_tiles,),
        in_specs=[
            pl.BlockSpec((8, TE), lambda t, c: (t, 0)),          # src ids (lane-dense)
            pl.BlockSpec((8, TE), lambda t, c: (t, 0)),          # local dst ids (lane-dense)
            pl.BlockSpec((N_pad, C_pad), lambda t, c: (0, 0)),   # resident node table
            pl.BlockSpec((TE, H), lambda t, c: (t, 0)),          # ee slab
        ],
        out_specs=[
            pl.BlockSpec((TN, HF), lambda t, c: (t, 0)),         # rst tile
            pl.BlockSpec((TE, H), lambda t, c: (t, 0)),          # attention slab
        ],
    )

    flops2 = int(num_tiles * (2 * TN * TE * (3 * H + HF) + 2 * TE * H * HF))
    bytes2 = int(4 * (N_pad * C_pad + num_tiles * 8 * TE * 2
                      + E_pad * H + N_pad * HF + E_pad * H))
    cparams = pltpu.CompilerParams(dimension_semantics=("parallel",),
                                   vmem_limit_bytes=vmem_limit)

    def run_edge(gather_mode):
        return pl.pallas_call(
            make_edge_kernel(gather_mode),
            grid_spec=grid_spec,
            out_shape=(jax.ShapeDtypeStruct((N_pad, HF), jnp.float32),
                       jax.ShapeDtypeStruct((E_pad, H), jnp.float32)),
            compiler_params=cparams,
            cost_estimate=pl.CostEstimate(flops=flops2,
                                          transcendentals=int(2 * E_pad * H),
                                          bytes_accessed=bytes2),
        )(counts_j, src_rows_j, dloc_rows_j, node_tab, ee_pad)

    try:
        rst_pad, a_pad = jax.block_until_ready(run_edge("take"))
    except Exception:
        # TODO(synk): this Pallas build lacks the vectorized dynamic row-gather
        # lowering; fall back to the exact one-hot MXU gather (O(N_pad*TE*C)/tile).
        rst_pad, a_pad = run_edge("onehot")

    # ---- un-pad / un-sort back to original edge order (glue) ----
    a_sorted = a_pad[pos_sorted]                                   # (E, H), dst-sorted order
    a = jnp.zeros((E, H), jnp.float32).at[order].set(a_sorted)     # original edge order
    rst = rst_pad[:N].reshape(N, H, F)

    # TODO(synk): residual / bias / activation / res_attn / attn_drop / feat_drop /
    # average_na / average_sa branches are inactive under the module defaults used here.
    return rst, a.reshape(E, H, 1)


# ---------------- demo ----------------

if __name__ == "__main__":
    # nodes, in_feats, heads, out_feats, edge_feats, num_etypes
    N, Fin, H, F, EF, NET = 16, 32, 4, 8, 16, 3
    n_extra = 48

    key = jax.random.PRNGKey(0)
    k1, k2, k3, k4, k5, k6, k7, k8, k9, k10 = jax.random.split(key, 10)

    # graph: self-loops (so every node has an incoming edge) + random edges
    src = jnp.concatenate([jnp.arange(N), jax.random.randint(k1, (n_extra,), 0, N)]).astype(jnp.int32)
    dst = jnp.concatenate([jnp.arange(N), jax.random.randint(k2, (n_extra,), 0, N)]).astype(jnp.int32)
    E = int(src.shape[0])
    e_feat0 = jax.random.randint(k3, (E,), 0, NET).astype(jnp.int32)

    feat = jax.random.normal(k4, (N, Fin), dtype=jnp.float32)

    # deterministic xavier-ish parameter init (synthetic, not a checkpoint load)
    gain = 2.0 ** 0.5
    params = {
        "W_fc": gain * jax.random.normal(k5, (Fin, H * F), jnp.float32)
                * (2.0 / (Fin + H * F)) ** 0.5,
        "W_fc_e": gain * jax.random.normal(k6, (EF, H * EF), jnp.float32)
                  * (2.0 / (EF + H * EF)) ** 0.5,
        "attn_l": 0.1 * jax.random.normal(k7, (1, H, F), jnp.float32),
        "attn_r": 0.1 * jax.random.normal(k8, (1, H, F), jnp.float32),
        "attn_e": 0.1 * jax.random.normal(k9, (1, H, EF), jnp.float32),
        "edge_emb": jax.random.normal(k10, (NET, EF), jnp.float32),
    }

    rst, a = my_gat_conv2_forward(feat, e_feat0, src, dst, params,
                                  num_heads=H, out_feats=F, edge_feats=EF)
    jax.block_until_ready((rst, a))
    assert rst.shape == (N, H, F) and a.shape == (E, H, 1)
    assert bool(jnp.all(jnp.isfinite(rst))) and bool(jnp.all(jnp.isfinite(a)))

    # pure-JAX reference of the module's default forward path
    def reference():
        feat_src = (feat @ params["W_fc"]).reshape(N, H, F)
        eproj = (params["edge_emb"][e_feat0] @ params["W_fc_e"]).reshape(E, H, EF)
        ee = (eproj * params["attn_e"]).sum(-1)
        el = (feat_src * params["attn_l"]).sum(-1)
        er = (feat_src * params["attn_r"]).sum(-1)
        e = el[src] + er[dst] + ee
        e = jnp.where(e > 0, e, NEG_SLOPE * e)
        m = jnp.full((N, H), -jnp.inf).at[dst].max(e)
        p = jnp.exp(e - m[dst])
        den = jnp.zeros((N, H)).at[dst].add(p)
        a_r = p / den[dst]
        rst_r = jnp.zeros((N, H, F)).at[dst].add(a_r[:, :, None] * feat_src[src])
        return rst_r, a_r

    rst_ref, a_ref = reference()
    np.testing.assert_allclose(np.asarray(a[:, :, 0]), np.asarray(a_ref),
                               rtol=3e-2, atol=3e-3)
    np.testing.assert_allclose(np.asarray(rst), np.asarray(rst_ref),
                               rtol=3e-2, atol=3e-2)

    # sanity: edge-softmax weights sum to 1 over incoming edges of every dst node
    deg = jnp.zeros((N,), jnp.float32).at[dst].add(1.0)
    asum = jnp.zeros((N, H), jnp.float32).at[dst].add(a[:, :, 0])
    err = jnp.abs(jnp.where(deg[:, None] > 0, asum - 1.0, 0.0))
    assert bool(jnp.all(err < 1e-2))

    print("KERNEL_OK")
</pallas_src>

<mosaic_0001>
module attributes {stable_mosaic.version = 11 : i64} {
  func.func @node_proj_kernel(%arg0: i32, %arg1: memref<128x32xf32, #tpu.memory_space<vmem>>, %arg2: memref<32x128xf32, #tpu.memory_space<vmem>>, %arg3: memref<128x128xf32, #tpu.memory_space<vmem>>) attributes {dimension_semantics = [#tpu.dimension_semantics<parallel>], iteration_bounds = array<i64: 1>, scalar_prefetch = 0 : i64, scratch_operands = 0 : i64, tpu.core_type = #tpu.core_type<tc>, window_params = [{transform_indices = @transform_0, window_bounds = array<i64: 128, 32>}, {pipeline_mode = #tpu.pipeline_mode<synchronous>, transform_indices = @transform_1, window_bounds = array<i64: 32, 128>}, {transform_indices = @transform_2, window_bounds = array<i64: 128, 128>}]} {
    %c0 = arith.constant 0 : index
    %c0_0 = arith.constant 0 : index
    %0 = vector.load %arg1[%c0, %c0_0] : memref<128x32xf32, #tpu.memory_space<vmem>>, vector<128x32xf32>
    %c0_1 = arith.constant 0 : index
    %c0_2 = arith.constant 0 : index
    %1 = vector.load %arg2[%c0_1, %c0_2] : memref<32x128xf32, #tpu.memory_space<vmem>>, vector<32x128xf32>
    %cst = arith.constant dense<0.000000e+00> : vector<128x128xf32>
    %2 = tpu.matmul %0, %1, %cst {dimension_numbers = #tpu.dot_dimension_numbers<[1], [0], [0], [1], [0, 0, 1, 1], [], []>} : vector<128x32xf32>, vector<32x128xf32>, vector<128x128xf32> -> vector<128x128xf32>
    %c0_3 = arith.constant 0 : index
    %c0_4 = arith.constant 0 : index
    %3 = vector.load %arg3[%c0_3, %c0_4] : memref<128x128xf32, #tpu.memory_space<vmem>>, vector<128x128xf32>
    tpu.vector_store %arg3[%c0_3, %c0_4], %2 {strides = array<i32>} : memref<128x128xf32, #tpu.memory_space<vmem>>, vector<128x128xf32>,
    return
  }
  func.func @transform_0(%arg0: i32) -> (i32, i32) {
    %c0_i32 = arith.constant 0 : i32
    %c0_i32_0 = arith.constant 0 : i32
    return %arg0, %c0_i32 : i32, i32
  }
  func.func @transform_1(%arg0: i32) -> (i32, i32) {
    %c0_i32 = arith.constant 0 : i32
    %c0_i32_0 = arith.constant 0 : i32
    %c0_i32_1 = arith.constant 0 : i32
    return %c0_i32, %c0_i32_0 : i32, i32
  }
  func.func @transform_2(%arg0: i32) -> (i32, i32) {
    %c0_i32 = arith.constant 0 : i32
    %c0_i32_0 = arith.constant 0 : i32
    return %arg0, %c0_i32 : i32, i32
  }
}

</mosaic_0001>

<llo_original>
// kernel: tpu_custom_call.1
$region0: #{tpu_custom_call.1}
  #allocation0 [shape = 'u32[]', space=smem, size = 0x4, offset = 0x4, fixed_abs, tag = 'smem constant byte address 0x4 - core index']
  #allocation1 [shape = 'u32[72,128]{1,0:T(1,128)}', space=vmem, size = 0x9000, scoped, tag = 'internal scratch']
  %s0 = inlined_call_operand.vmem [shape: f32[128,32], index: 0, kind: input, shape index: {}]
  %s1 = inlined_call_operand.vmem [shape: f32[32,128], index: 1, kind: input, shape index: {}]
  %s2 = inlined_call_operand.hbm [shape: f32[128,128], index: 2, kind: output, shape index: {}]
  %s3 = sld [smem:[#allocation0]]
  $region18: #{tpu_custom_call.1} parent=0
    _
  %s5 = ssub.s32 1, %s3
  %s6 = scalar_select 0, %s5, %s3
  $region1: #{tpu_custom_call.1} parent=0
    #allocation2 [shape = 'u8[65536]{0}', space=vmem, size = 0x10000, scoped, tag = 'output window, operand 0, single buffered']
    #allocation3 [shape = 's32[1]{0}', space=sflag, size = 0x4, scoped, tag = 'scoped memory for tpu_custom_call.1']
    %7 = vsyncpa [#allocation3], 0
    // Predicated region
    $region2: #{tpu_custom_call.1} parent=1 // pred_check
      _
    $region3: #{tpu_custom_call.1} parent=1 // pred_check_branch
      %9 = sbr.rel (0) target = $region5
    $region4: #{tpu_custom_call.1} parent=1 // pred_region
      _
    $region5: #{tpu_custom_call.1} parent=1 // pred_fallthru
      _
    // Predicated region
    $region6: #{tpu_custom_call.1} parent=1 // pred_check
      _
    $region7: #{tpu_custom_call.1} parent=1 // pred_check_branch
      %11 = sbr.rel (0) target = $region9
    $region8: #{tpu_custom_call.1} parent=1 // pred_region
      _
    $region9: #{tpu_custom_call.1} parent=1 // pred_fallthru
      _
    %v12 = vld [vmem:[%s0] sm:$0xff]
    %v13 = vld [vmem:[%s0 + $0x8] sm:$0xff]
    %v14 = vld [vmem:[%s0 + $0x10] sm:$0xff]
    %v15 = vld [vmem:[%s0 + $0x18] sm:$0xff]
    %v16 = vld [vmem:[%s0 + $0x20] sm:$0xff]
    %v17 = vld [vmem:[%s0 + $0x28] sm:$0xff]
    %v18 = vld [vmem:[%s0 + $0x30] sm:$0xff]
    %v19 = vld [vmem:[%s0 + $0x38] sm:$0xff]
    %v20 = vld [vmem:[%s0 + $0x40] sm:$0xff]
    %v21 = vld [vmem:[%s0 + $0x48] sm:$0xff]
    %v22 = vld [vmem:[%s0 + $0x50] sm:$0xff]
    %v23 = vld [vmem:[%s0 + $0x58] sm:$0xff]
    %v24 = vld [vmem:[%s0 + $0x60] sm:$0xff]
    %v25 = vld [vmem:[%s0 + $0x68] sm:$0xff]
    %v26 = vld [vmem:[%s0 + $0x70] sm:$0xff]
    %v27 = vld [vmem:[%s0 + $0x78] sm:$0xff]
    %v28 = vld [vmem:[%s1] sm:$0xff]
    %v29 = vld [vmem:[%s1 + $0x8] sm:$0xff]
    %v30 = vld [vmem:[%s1 + $0x10] sm:$0xff]
    %v31 = vld [vmem:[%s1 + $0x18] sm:$0xff]
    %vm32 = vcmask 261120
    %v34 = vsel %vm32, %v12, 0
    %v37 = vsel %vm32, %v13, 0
    %v40 = vsel %vm32, %v14, 0
    %v43 = vsel %vm32, %v15, 0
    %v46 = vsel %vm32, %v16, 0
    %v49 = vsel %vm32, %v17, 0
    %v52 = vsel %vm32, %v18, 0
    %v55 = vsel %vm32, %v19, 0
    %v58 = vsel %vm32, %v20, 0
    %v61 = vsel %vm32, %v21, 0
    %v64 = vsel %vm32, %v22, 0
    %v67 = vsel %vm32, %v23, 0
    %v70 = vsel %vm32, %v24, 0
    %v73 = vsel %vm32, %v25, 0
    %v76 = vsel %vm32, %v26, 0
    %v79 = vsel %vm32, %v27, 0
    %81 = vmatpush.msra.mxu0 0.0
    %82 = vmatpush.msra.mxu0 0.0
    %83 = vmatpush.msra.mxu0 0.0
    %84 = vmatpush.msra.mxu0 0.0
    %85 = vmatpush.msra.mxu0 0.0
    %86 = vmatpush.msra.mxu0 0.0
    %87 = vmatpush.msra.mxu0 0.0
    %88 = vmatpush.msra.mxu0 0.0
    %89 = vmatpush.msra.mxu0 0.0
    %90 = vmatpush.msra.mxu0 0.0
    %91 = vmatpush.msra.mxu0 0.0
    %92 = vmatpush.msra.mxu0 0.0
    %93 = vmatpush.msra.mxu0 %v31
    %94 = vmatpush.msra.mxu0 %v30
    %95 = vmatpush.msra.mxu0 %v29
    %96 = vmatpush.msra.mxu0 %v28
    %97 = vmatmul.f32.gmra.mxu0 %v34
    %v98 = vpop.f32.mrf.mxu0
    %v99 = vadd.f32 0.0, %v98
    %100 = vmatmul.f32.gmra.mxu0 %v37
    %v101 = vpop.f32.mrf.mxu0
    %v102 = vadd.f32 0.0, %v101
    %103 = vmatmul.f32.gmra.mxu0 %v40
    %v104 = vpop.f32.mrf.mxu0
    %v105 = vadd.f32 0.0, %v104
    %106 = vmatmul.f32.gmra.mxu0 %v43
    %v107 = vpop.f32.mrf.mxu0
    %v108 = vadd.f32 0.0, %v107
    %109 = vmatmul.f32.gmra.mxu0 %v46
    %v110 = vpop.f32.mrf.mxu0
    %v111 = vadd.f32 0.0, %v110
    %112 = vmatmul.f32.gmra.mxu0 %v49
    %v113 = vpop.f32.mrf.mxu0
    %v114 = vadd.f32 0.0, %v113
    %115 = vmatmul.f32.gmra.mxu0 %v52
    %v116 = vpop.f32.mrf.mxu0
    %v117 = vadd.f32 0.0, %v116
    %118 = vmatmul.f32.gmra.mxu0 %v55
    %v119 = vpop.f32.mrf.mxu0
    %v120 = vadd.f32 0.0, %v119
    %121 = vmatmul.f32.gmra.mxu0 %v58
    %v122 = vpop.f32.mrf.mxu0
    %v123 = vadd.f32 0.0, %v122
    %124 = vmatmul.f32.gmra.mxu0 %v61
    %v125 = vpop.f32.mrf.mxu0
    %v126 = vadd.f32 0.0, %v125
    %127 = vmatmul.f32.gmra.mxu0 %v64
    %v128 = vpop.f32.mrf.mxu0
    %v129 = vadd.f32 0.0, %v128
    %130 = vmatmul.f32.gmra.mxu0 %v67
    %v131 = vpop.f32.mrf.mxu0
    %v132 = vadd.f32 0.0, %v131
    %133 = vmatmul.f32.gmra.mxu0 %v70
    %v134 = vpop.f32.mrf.mxu0
    %v135 = vadd.f32 0.0, %v134
    %136 = vmatmul.f32.gmra.mxu0 %v73
    %v137 = vpop.f32.mrf.mxu0
    %v138 = vadd.f32 0.0, %v137
    %139 = vmatmul.f32.gmra.mxu0 %v76
    %v140 = vpop.f32.mrf.mxu0
    %v141 = vadd.f32 0.0, %v140
    %142 = vmatmul.f32.gmra.mxu0 %v79
    %v143 = vpop.f32.mrf.mxu0
    %v144 = vadd.f32 0.0, %v143
    %145 = vdwg.mxu0
    %146 = vst [vmem:[#allocation2] sm:$0xff] %v99
    %147 = vst [vmem:[#allocation2 + $0x8] sm:$0xff] %v102
    %148 = vst [vmem:[#allocation2 + $0x10] sm:$0xff] %v105
    %149 = vst [vmem:[#allocation2 + $0x18] sm:$0xff] %v108
    %150 = vst [vmem:[#allocation2 + $0x20] sm:$0xff] %v111
    %151 = vst [vmem:[#allocation2 + $0x28] sm:$0xff] %v114
    %152 = vst [vmem:[#allocation2 + $0x30] sm:$0xff] %v117
    %153 = vst [vmem:[#allocation2 + $0x38] sm:$0xff] %v120
    %154 = vst [vmem:[#allocation2 + $0x40] sm:$0xff] %v123
    %155 = vst [vmem:[#allocation2 + $0x48] sm:$0xff] %v126
    %156 = vst [vmem:[#allocation2 + $0x50] sm:$0xff] %v129
    %157 = vst [vmem:[#allocation2 + $0x58] sm:$0xff] %v132
    %158 = vst [vmem:[#allocation2 + $0x60] sm:$0xff] %v135
    %159 = vst [vmem:[#allocation2 + $0x68] sm:$0xff] %v138
    %160 = vst [vmem:[#allocation2 + $0x70] sm:$0xff] %v141
    %161 = vst [vmem:[#allocation2 + $0x78] sm:$0xff] %v144
    // Predicated region
    $region10: #{tpu_custom_call.1} parent=1 // pred_check
      _
    $region11: #{tpu_custom_call.1} parent=1 // pred_check_branch
      %163 = sbr.rel (0) target = $region13
    $region12: #{tpu_custom_call.1} parent=1 // pred_region
      %165 = vsyncadd [#allocation3], 0
      %s166 = sshll.u32 [#allocation2], 4
      %s167 = int_to_ptr.vmem [resolvable:$true] %s166
      %s168 = sshll.u32 %s2, 4
      %s169 = int_to_ptr.hbm [resolvable:$true] %s168
      %174 = dma.vmem_to_hbm [thread:$0]  %s167, 2048, %s169, [#allocation3], 128, 128, 8
    $region13: #{tpu_custom_call.1} parent=1 // pred_fallthru
      _
    // Predicated region
    $region14: #{tpu_custom_call.1} parent=1 // pred_check
      _
    $region15: #{tpu_custom_call.1} parent=1 // pred_check_branch
      %176 = sbr.rel (0) target = $region17
    $region16: #{tpu_custom_call.1} parent=1 // pred_region
      %178 = dma.done [#allocation3], 2048
    $region17: #{tpu_custom_call.1} parent=1 // pred_fallthru
      _
    %179 = vsyncpa [#allocation3], 1

</llo_original>
